<compile_context>
chip_gen: v5e
topology: v5e:2x2
jax: 0.10.0
libtpu: 0.0.40
codegen_flags: <defaults>
</compile_context>

<pallas_src>
import jax
import jax.numpy as jnp
from jax.experimental import pallas as pl
from jax.experimental.pallas import tpu as pltpu

ATT_DIM = 256                       # hard-coded in the PyTorch module
NUM_CLASSES = 5                     # nn.Linear(256, 5)
SCALE = ATT_DIM ** (-0.5)


def _ft_loss_kernel(x_ref, w_ref, vt_ref, wl_ref, bl_ref, o_ref):
    """One block of Bt batch elements per grid step.

    x_ref  : (Bt, 256, T)  NATIVE channel-first features (no HBM permute)
    w_ref  : (256, 256)    attention projection W
    vt_ref : (1, 256)      V transposed (original V is (256, 1))
    wl_ref : (256, 5)      linear head weight (== lin.weight.T)
    bl_ref : (1, 5)        linear head bias
    o_ref  : (Bt, 5)       logits for this block
    """
    Bt, C, T = x_ref.shape
    x = x_ref[...]                                     # (Bt, 256, T)

    # permute(0, 2, 1): in-VMEM transpose (XLU), not an HBM pass.
    xt = jnp.transpose(x, (0, 2, 1))                   # (Bt, T, 256)
    x2 = xt.reshape(Bt * T, C)                         # (Bt*T, 256)

    # e = matmul(x, W)  -- single big MXU matmul for the whole block
    e = jnp.dot(x2, w_ref[...], preferred_element_type=jnp.float32)

    # e = matmul(tanh(e), V) * scale  -- V is (256, 1): lane-reduce vs V^T
    ev = jnp.sum(jnp.tanh(e) * vt_ref[...], axis=-1, keepdims=True) * SCALE

    # exp-softmax over time (no max-subtraction, matching PyTorch exactly)
    n1 = jnp.exp(ev).reshape(Bt, T, 1)                 # (Bt, T, 1)
    n2 = jnp.sum(n1, axis=1, keepdims=True)            # (Bt, 1, 1)

    # weighted sum over time, then ONE normalisation per batch row
    acc = jnp.sum(n1 * xt, axis=1)                     # (Bt, 256)
    feats = acc * (1.0 / n2[:, 0, :])                  # (Bt, 256)

    # fused linear head: feats @ W_lin + b_lin
    out = jnp.dot(feats, wl_ref[...],
                  preferred_element_type=jnp.float32) + bl_ref[...]
    o_ref[...] = out.astype(o_ref.dtype)


def _pick_block_batch(B, T, x_tile_budget_bytes=4 * 1024 * 1024):
    """Batch elements per grid step: divide B, keep tile ~MiB, keep >=2 steps."""
    t_pad = ((T + 127) // 128) * 128          # lane padding of the native tile
    bytes_per_batch = ATT_DIM * t_pad * 4     # f32
    max_bt = max(1, x_tile_budget_bytes // bytes_per_batch)
    best = 1
    for d in range(1, B + 1):
        if B % d == 0 and d <= max_bt:
            best = d
    # keep >= 2 grid steps when possible so both v7x TensorCores get work
    if best == B and B > 1:
        for d in range(B - 1, 0, -1):
            if B % d == 0:
                best = d
                break
    return best


def ft_loss_forward(x, W, V, W_lin, b_lin):
    """ft_loss.forward: lin(attention(time_model(x))).

    x     : (B, 256, T) float32 channel-first (as fed to the PyTorch model)
    W     : (256, 256), V : (256, 1)   attention parameters
    W_lin : (256, 5),  b_lin : (5,)    linear head (W_lin == lin.weight.T)
    returns (B, 5) float32 logits
    """
    B, C, T = x.shape
    assert C == ATT_DIM

    time = x   # TODO(synk): BaseNet (time_model) unavailable -> identity

    Bt = _pick_block_batch(B, T)
    nb = B // Bt

    Vt = V.reshape(1, ATT_DIM)
    bl = b_lin.reshape(1, NUM_CLASSES)

    out = pl.pallas_call(
        _ft_loss_kernel,
        out_shape=jax.ShapeDtypeStruct((nb, Bt, NUM_CLASSES), jnp.float32),
        grid_spec=pltpu.PrefetchScalarGridSpec(
            num_scalar_prefetch=0,
            grid=(nb,),
            in_specs=[
                pl.BlockSpec((Bt, ATT_DIM, T), lambda i: (i, 0, 0)),
                pl.BlockSpec((ATT_DIM, ATT_DIM), lambda i: (0, 0)),
                pl.BlockSpec((1, ATT_DIM), lambda i: (0, 0)),
                pl.BlockSpec((ATT_DIM, NUM_CLASSES), lambda i: (0, 0)),
                pl.BlockSpec((1, NUM_CLASSES), lambda i: (0, 0)),
            ],
            out_specs=pl.BlockSpec((None, Bt, NUM_CLASSES),
                                   lambda i: (i, 0, 0)),
        ),
        compiler_params=pltpu.CompilerParams(
            dimension_semantics=("parallel",)),
    )(time, W, Vt, W_lin, bl)

    return out.reshape(B, NUM_CLASSES)


def _reference(x, W, V, W_lin, b_lin):
    """Pure-JAX reference mirroring the PyTorch code."""
    xt = jnp.transpose(x, (0, 2, 1))                     # (B, T, 256)
    e = jnp.matmul(xt, W)                                # (B, T, 256)
    e = jnp.matmul(jnp.tanh(e), V)                       # (B, T, 1)
    e = e * SCALE
    n1 = jnp.exp(e)
    n2 = jnp.sum(jnp.exp(e), axis=1, keepdims=True)
    alpha = n1 / n2
    feats = jnp.sum(alpha * xt, axis=1)                  # (B, 256)
    return feats @ W_lin + b_lin                         # (B, 5)


if __name__ == "__main__":
    key = jax.random.PRNGKey(0)
    kx, kw, kv, kwl, kbl = jax.random.split(key, 5)

    B, T = 2, 8                                          # small test shapes
    x = jax.random.normal(kx, (B, ATT_DIM, T), dtype=jnp.float32)

    # Deterministic parameter init (PyTorch uses torch.randn for W and V).
    W = jax.random.normal(kw, (ATT_DIM, ATT_DIM), dtype=jnp.float32)
    V = jax.random.normal(kv, (ATT_DIM, 1), dtype=jnp.float32)
    W_lin = jax.random.normal(kwl, (ATT_DIM, NUM_CLASSES),
                              dtype=jnp.float32) * 0.0625
    b_lin = jax.random.normal(kbl, (NUM_CLASSES,), dtype=jnp.float32) * 0.0625

    out = ft_loss_forward(x, W, V, W_lin, b_lin)
    out = jax.block_until_ready(out)

    ref = _reference(x, W, V, W_lin, b_lin)
    assert out.shape == (B, NUM_CLASSES)
    assert jnp.allclose(out, ref, atol=2e-4, rtol=2e-4), (
        float(jnp.max(jnp.abs(out - ref))))

    print("KERNEL_OK")
</pallas_src>

<mosaic_0001>
module attributes {stable_mosaic.version = 11 : i64} {
  func.func @_ft_loss_kernel(%arg0: i32, %arg1: memref<1x256x8xf32, #tpu.memory_space<vmem>>, %arg2: memref<256x256xf32, #tpu.memory_space<vmem>>, %arg3: memref<1x256xf32, #tpu.memory_space<vmem>>, %arg4: memref<256x5xf32, #tpu.memory_space<vmem>>, %arg5: memref<1x5xf32, #tpu.memory_space<vmem>>, %arg6: memref<1x1x5xf32, #tpu.memory_space<vmem>>) attributes {dimension_semantics = [#tpu.dimension_semantics<parallel>], iteration_bounds = array<i64: 2>, scalar_prefetch = 0 : i64, scratch_operands = 0 : i64, tpu.core_type = #tpu.core_type<tc>, window_params = [{transform_indices = @transform_0, window_bounds = array<i64: 1, 256, 8>}, {pipeline_mode = #tpu.pipeline_mode<synchronous>, transform_indices = @transform_1, window_bounds = array<i64: 256, 256>}, {pipeline_mode = #tpu.pipeline_mode<synchronous>, transform_indices = @transform_2, window_bounds = array<i64: 1, 256>}, {pipeline_mode = #tpu.pipeline_mode<synchronous>, transform_indices = @transform_3, window_bounds = array<i64: 256, 5>}, {pipeline_mode = #tpu.pipeline_mode<synchronous>, transform_indices = @transform_4, window_bounds = array<i64: 1, 5>}, {transform_indices = @transform_5, window_bounds = array<i64: 1, 1, 5>}]} {
    %c0 = arith.constant 0 : index
    %c0_0 = arith.constant 0 : index
    %c0_1 = arith.constant 0 : index
    %0 = vector.load %arg1[%c0, %c0_0, %c0_1] : memref<1x256x8xf32, #tpu.memory_space<vmem>>, vector<1x256x8xf32>
    %1 = tpu.transpose %0, [0, 2, 1] : vector<1x256x8xf32> -> vector<1x8x256xf32>
    %2 = vector.shape_cast %1 : vector<1x8x256xf32> to vector<8x256xf32>
    %c0_2 = arith.constant 0 : index
    %c0_3 = arith.constant 0 : index
    %3 = vector.load %arg2[%c0_2, %c0_3] : memref<256x256xf32, #tpu.memory_space<vmem>>, vector<256x256xf32>
    %cst = arith.constant dense<0.000000e+00> : vector<8x256xf32>
    %4 = tpu.matmul %2, %3, %cst {dimension_numbers = #tpu.dot_dimension_numbers<[1], [0], [0], [1], [0, 0, 1, 1], [], []>} : vector<8x256xf32>, vector<256x256xf32>, vector<8x256xf32> -> vector<8x256xf32>
    %5 = math.tanh %4 : vector<8x256xf32>
    %c0_4 = arith.constant 0 : index
    %c0_5 = arith.constant 0 : index
    %6 = vector.load %arg3[%c0_4, %c0_5] : memref<1x256xf32, #tpu.memory_space<vmem>>, vector<1x256xf32>
    %7 = vector.broadcast %6 : vector<1x256xf32> to vector<8x256xf32>
    %8 = arith.mulf %5, %7 : vector<8x256xf32>
    %cst_6 = arith.constant dense<0.000000e+00> : vector<8xf32>
    %9 = vector.multi_reduction <add>, %8, %cst_6 [1] : vector<8x256xf32> to vector<8xf32>
    %10 = vector.shape_cast %9 : vector<8xf32> to vector<8x1xf32>
    %cst_7 = arith.constant 6.250000e-02 : f32
    %11 = vector.broadcast %cst_7 : f32 to vector<8x1xf32>
    %12 = arith.mulf %10, %11 : vector<8x1xf32>
    %13 = math.exp %12 : vector<8x1xf32>
    %14 = vector.shape_cast %13 : vector<8x1xf32> to vector<1x8x1xf32>
    %cst_8 = arith.constant dense<0.000000e+00> : vector<1x1xf32>
    %15 = vector.multi_reduction <add>, %14, %cst_8 [1] : vector<1x8x1xf32> to vector<1x1xf32>
    %16 = vector.shape_cast %15 : vector<1x1xf32> to vector<1x1x1xf32>
    %17 = vector.broadcast %14 : vector<1x8x1xf32> to vector<1x8x256xf32>
    %18 = arith.mulf %17, %1 : vector<1x8x256xf32>
    %cst_9 = arith.constant dense<0.000000e+00> : vector<1x256xf32>
    %19 = vector.multi_reduction <add>, %18, %cst_9 [1] : vector<1x8x256xf32> to vector<1x256xf32>
    %20 = vector.shape_cast %16 : vector<1x1x1xf32> to vector<1x1xf32>
    %cst_10 = arith.constant 1.000000e+00 : f32
    %21 = vector.broadcast %cst_10 : f32 to vector<1x1xf32>
    %22 = arith.divf %21, %20 : vector<1x1xf32>
    %23 = vector.broadcast %22 : vector<1x1xf32> to vector<1x256xf32>
    %24 = arith.mulf %19, %23 : vector<1x256xf32>
    %c0_11 = arith.constant 0 : index
    %c0_12 = arith.constant 0 : index
    %25 = vector.load %arg4[%c0_11, %c0_12] : memref<256x5xf32, #tpu.memory_space<vmem>>, vector<256x5xf32>
    %cst_13 = arith.constant dense<0.000000e+00> : vector<1x5xf32>
    %26 = tpu.matmul %24, %25, %cst_13 {dimension_numbers = #tpu.dot_dimension_numbers<[1], [0], [0], [1], [0, 0, 1, 1], [], []>} : vector<1x256xf32>, vector<256x5xf32>, vector<1x5xf32> -> vector<1x5xf32>
    %c0_14 = arith.constant 0 : index
    %c0_15 = arith.constant 0 : index
    %27 = vector.load %arg5[%c0_14, %c0_15] : memref<1x5xf32, #tpu.memory_space<vmem>>, vector<1x5xf32>
    %28 = arith.addf %26, %27 : vector<1x5xf32>
    %c0_16 = arith.constant 0 : index
    %c0_17 = arith.constant 0 : index
    %c0_18 = arith.constant 0 : index
    %29 = vector.load %arg6[%c0_16, %c0_17, %c0_18] : memref<1x1x5xf32, #tpu.memory_space<vmem>>, vector<1x1x5xf32>
    %30 = vector.shape_cast %29 : vector<1x1x5xf32> to vector<1x5xf32>
    %31 = vector.shape_cast %28 : vector<1x5xf32> to vector<1x1x5xf32>
    tpu.vector_store %arg6[%c0_16, %c0_17, %c0_18], %31 {strides = array<i32>} : memref<1x1x5xf32, #tpu.memory_space<vmem>>, vector<1x1x5xf32>,
    return
  }
  func.func @transform_0(%arg0: i32) -> (i32, i32, i32) {
    %c0_i32 = arith.constant 0 : i32
    %c0_i32_0 = arith.constant 0 : i32
    %c0_i32_1 = arith.constant 0 : i32
    return %arg0, %c0_i32, %c0_i32_0 : i32, i32, i32
  }
  func.func @transform_1(%arg0: i32) -> (i32, i32) {
    %c0_i32 = arith.constant 0 : i32
    %c0_i32_0 = arith.constant 0 : i32
    %c0_i32_1 = arith.constant 0 : i32
    return %c0_i32, %c0_i32_0 : i32, i32
  }
  func.func @transform_2(%arg0: i32) -> (i32, i32) {
    %c0_i32 = arith.constant 0 : i32
    %c0_i32_0 = arith.constant 0 : i32
    %c0_i32_1 = arith.constant 0 : i32
    return %c0_i32, %c0_i32_0 : i32, i32
  }
  func.func @transform_3(%arg0: i32) -> (i32, i32) {
    %c0_i32 = arith.constant 0 : i32
    %c0_i32_0 = arith.constant 0 : i32
    %c0_i32_1 = arith.constant 0 : i32
    return %c0_i32, %c0_i32_0 : i32, i32
  }
  func.func @transform_4(%arg0: i32) -> (i32, i32) {
    %c0_i32 = arith.constant 0 : i32
    %c0_i32_0 = arith.constant 0 : i32
    %c0_i32_1 = arith.constant 0 : i32
    return %c0_i32, %c0_i32_0 : i32, i32
  }
  func.func @transform_5(%arg0: i32) -> (i32, i32, i32) {
    %c0_i32 = arith.constant 0 : i32
    %c0_i32_0 = arith.constant 0 : i32
    %c0_i32_1 = arith.constant 0 : i32
    return %arg0, %c0_i32, %c0_i32_0 : i32, i32, i32
  }
}

</mosaic_0001>

<llo_original>
// kernel: tpu_custom_call.1
$region0: #{tpu_custom_call.1}
  #allocation0 [shape = 'u32[]', space=smem, size = 0x4, offset = 0x4, fixed_abs, tag = 'smem constant byte address 0x4 - core index']
  #allocation1 [shape = 'u32[72,128]{1,0:T(1,128)}', space=vmem, size = 0x9000, scoped, tag = 'internal scratch']
  %s0 = inlined_call_operand.vmem [shape: f32[2,256,8], index: 0, kind: input, shape index: {}]
  %s1 = inlined_call_operand.vmem [shape: f32[256,256], index: 1, kind: input, shape index: {}]
  %s2 = inlined_call_operand.vmem [shape: f32[1,256], index: 2, kind: input, shape index: {}]
  %s3 = inlined_call_operand.vmem [shape: f32[256,5], index: 3, kind: input, shape index: {}]
  %s4 = inlined_call_operand.vmem [shape: f32[1,5], index: 4, kind: input, shape index: {}]
  %s5 = inlined_call_operand.hbm [shape: f32[2,1,5], index: 5, kind: output, shape index: {}]
  %s6 = sld [smem:[#allocation0]]
  $region53: #{tpu_custom_call.1} parent=0
    _
  %s8 = ssub.s32 1, %s6
  %s9 = scalar_select 0, %s8, %s6
  $region1: #{tpu_custom_call.1} parent=0
    #allocation2 [shape = 'u8[1024]{0}', space=vmem, size = 0x400, scoped, tag = 'output window, operand 0']
    #allocation3 [shape = 's32[2]{0}', space=sflag, size = 0x8, scoped, tag = 'scoped memory for tpu_custom_call.1']
    %10 = vsyncpa [#allocation3], 0
    %s11 = scalar_lea.sflag [#allocation3], 1
    %12 = vsyncpa %s11, 0
    loop: start=0, step=1, limit=4
    $region2: #{tpu_custom_call.1} parent=1 // loop_pre_header
      _
    $region3: #{tpu_custom_call.1} parent=1 // loop_header
      %s14 = sphi 0, %s18
      %p15 = scmp.ge.s32.totalorder %s14, 4
      %s24 = sphi 0, %s26
      %s27 = sphi 0, %s24
      %s28 = sphi 0, %s27
      %s44 = sphi 0, %s28
      %s48 = sphi 0, %s48
      %s50 = sphi 0, %s48
      %s51 = sphi 0, %s50
      %s65 = sphi 0, %s51
      %s69 = sphi 0, %s69
      %s71 = sphi 0, %s69
      %s72 = sphi 0, %s71
      %s86 = sphi 0, %s72
      %s90 = sphi 0, %s90
      %s92 = sphi 0, %s90
      %s93 = sphi 0, %s92
      %s107 = sphi 0, %s93
      %s111 = sphi 0, %s111
      %s113 = sphi 0, %s111
      %s114 = sphi 0, %s113
      %s128 = sphi 0, %s114
      %s134 = sphi 0, %s136
      %s137 = sphi 0, %s134
      %s138 = sphi 0, %s137
      %s154 = sphi 0, %s138
    $region4: #{tpu_custom_call.1} parent=1 // loop_header_branch
      %17 = sbr.rel (%p15) target = $region8
    $region5: #{tpu_custom_call.1} parent=1 // loop_body
      %s19 = ssub.s32 %s14, 1
      %s20 = ssub.s32 %s14, 2
      %s21 = sadd.s32 %s14, 1
      %s22 = ssub.s32 %s14, %s21
      %p23 = scmp.eq.s32.totalorder %s22, 0
      %s25 = sadd.s32 %s24, 1
      %s26 = scalar_select %p23, %s24, %s25
      %p29 = pneg %p23
      %p30 = scmp.eq.s32.totalorder %s14, 1
      %p31 = por %p29, %p30
      %p32 = scmp.ne.s32.totalorder %s24, %s27
      %p33 = scmp.eq.s32.totalorder %s14, 0
      %p34 = por %p32, %p33
      %p35 = scmp.ne.s32.totalorder %s24, %s27
      %p36 = scmp.eq.s32.totalorder %s19, 1
      %p37 = por %p35, %p36
      %p38 = scmp.ne.s32.totalorder %s27, %s28
      %p39 = scmp.eq.s32.totalorder %s19, 0
      %p40 = por %p38, %p39
      %p41 = scmp.ne.s32.totalorder %s27, %s28
      %p42 = scmp.eq.s32.totalorder %s20, 1
      %p43 = por %p41, %p42
      %p45 = scmp.ne.s32.totalorder %s28, %s44
      %p46 = scmp.eq.s32.totalorder %s20, 0
      %p47 = por %p45, %p46
      %s49 = sadd.s32 %s48, 1
      %p52 = scmp.eq.s32.totalorder %s14, 1
      %p53 = scmp.ne.s32.totalorder %s48, %s50
      %p54 = scmp.eq.s32.totalorder %s14, 0
      %p55 = por %p53, %p54
      %p56 = scmp.ne.s32.totalorder %s48, %s50
      %p57 = scmp.eq.s32.totalorder %s19, 1
      %p58 = por %p56, %p57
      %p59 = scmp.ne.s32.totalorder %s50, %s51
      %p60 = scmp.eq.s32.totalorder %s19, 0
      %p61 = por %p59, %p60
      %p62 = scmp.ne.s32.totalorder %s50, %s51
      %p63 = scmp.eq.s32.totalorder %s20, 1
      %p64 = por %p62, %p63
      %p66 = scmp.ne.s32.totalorder %s51, %s65
      %p67 = scmp.eq.s32.totalorder %s20, 0
      %p68 = por %p66, %p67
      %s70 = sadd.s32 %s69, 1
      %p73 = scmp.eq.s32.totalorder %s14, 1
      %p74 = scmp.ne.s32.totalorder %s69, %s71
      %p75 = scmp.eq.s32.totalorder %s14, 0
      %p76 = por %p74, %p75
      %p77 = scmp.ne.s32.totalorder %s69, %s71
      %p78 = scmp.eq.s32.totalorder %s19, 1
      %p79 = por %p77, %p78
      %p80 = scmp.ne.s32.totalorder %s71, %s72
      %p81 = scmp.eq.s32.totalorder %s19, 0
      %p82 = por %p80, %p81
      %p83 = scmp.ne.s32.totalorder %s71, %s72
      %p84 = scmp.eq.s32.totalorder %s20, 1
      %p85 = por %p83, %p84
      %p87 = scmp.ne.s32.totalorder %s72, %s86
      %p88 = scmp.eq.s32.totalorder %s20, 0
      %p89 = por %p87, %p88
      %s91 = sadd.s32 %s90, 1
      %p94 = scmp.eq.s32.totalorder %s14, 1
      %p95 = scmp.ne.s32.totalorder %s90, %s92
      %p96 = scmp.eq.s32.totalorder %s14, 0
      %p97 = por %p95, %p96
      %p98 = scmp.ne.s32.totalorder %s90, %s92
      %p99 = scmp.eq.s32.totalorder %s19, 1
      %p100 = por %p98, %p99
      %p101 = scmp.ne.s32.totalorder %s92, %s93
      %p102 = scmp.eq.s32.totalorder %s19, 0
      %p103 = por %p101, %p102
      %p104 = scmp.ne.s32.totalorder %s92, %s93
      %p105 = scmp.eq.s32.totalorder %s20, 1
      %p106 = por %p104, %p105
      %p108 = scmp.ne.s32.totalorder %s93, %s107
      %p109 = scmp.eq.s32.totalorder %s20, 0
      %p110 = por %p108, %p109
      %s112 = sadd.s32 %s111, 1
      %p115 = scmp.eq.s32.totalorder %s14, 1
      %p116 = scmp.ne.s32.totalorder %s111, %s113
      %p117 = scmp.eq.s32.totalorder %s14, 0
      %p118 = por %p116, %p117
      %p119 = scmp.ne.s32.totalorder %s111, %s113
      %p120 = scmp.eq.s32.totalorder %s19, 1
      %p121 = por %p119, %p120
      %p122 = scmp.ne.s32.totalorder %s113, %s114
      %p123 = scmp.eq.s32.totalorder %s19, 0
      %p124 = por %p122, %p123
      %p125 = scmp.ne.s32.totalorder %s113, %s114
      %p126 = scmp.eq.s32.totalorder %s20, 1
      %p127 = por %p125, %p126
      %p129 = scmp.ne.s32.totalorder %s114, %s128
      %p130 = scmp.eq.s32.totalorder %s20, 0
      %p131 = por %p129, %p130
      %s132 = ssub.s32 %s14, %s21
      %p133 = scmp.eq.s32.totalorder %s132, 0
      %s135 = sadd.s32 %s134, 1
      %s136 = scalar_select %p133, %s134, %s135
      %p139 = pneg %p133
      %p140 = scmp.eq.s32.totalorder %s14, 1
      %p141 = por %p139, %p140
      %p142 = scmp.ne.s32.totalorder %s134, %s137
      %p143 = scmp.eq.s32.totalorder %s14, 0
      %p144 = por %p142, %p143
      %p145 = scmp.ne.s32.totalorder %s134, %s137
      %p146 = scmp.eq.s32.totalorder %s19, 1
      %p147 = por %p145, %p146
      %p148 = scmp.ne.s32.totalorder %s137, %s138
      %p149 = scmp.eq.s32.totalorder %s19, 0
      %p150 = por %p148, %p149
      %p151 = scmp.ne.s32.totalorder %s137, %s138
      %p152 = scmp.eq.s32.totalorder %s20, 1
      %p153 = por %p151, %p152
      %p155 = scmp.ne.s32.totalorder %s138, %s154
      %p156 = scmp.eq.s32.totalorder %s20, 0
      %p157 = por %p155, %p156
      %p158 = scmp.le.s32.totalorder 1, %s14
      %p159 = scmp.lt.s32.totalorder %s14, 3
      %p160 = pnand %p158, %p159
      %p161 = pneg %p160
      // Predicated region
      $region9: #{tpu_custom_call.1} parent=5 // pred_check
        _
      $region10: #{tpu_custom_call.1} parent=5 // pred_check_branch
        %163 = sbr.rel (%p160) target = $region12
      $region11: #{tpu_custom_call.1} parent=5 // pred_region
        %s164 = ssub.s32 %s14, 1
        // Predicated region
        $region13: #{tpu_custom_call.1} parent=11 // pred_check
          %p165 = pneg %p61
        $region14: #{tpu_custom_call.1} parent=11 // pred_check_branch
          %167 = sbr.rel (%p165) target = $region16
        $region15: #{tpu_custom_call.1} parent=11 // pred_region
          _
        $region16: #{tpu_custom_call.1} parent=11 // pred_fallthru
          _
        // Predicated region
        $region17: #{tpu_custom_call.1} parent=11 // pred_check
          %p168 = pneg %p82
        $region18: #{tpu_custom_call.1} parent=11 // pred_check_branch
          %170 = sbr.rel (%p168) target = $region20
        $region19: #{tpu_custom_call.1} parent=11 // pred_region
          _
        $region20: #{tpu_custom_call.1} parent=11 // pred_fallthru
          _
        // Predicated region
        $region21: #{tpu_custom_call.1} parent=11 // pred_check
          %p171 = pneg %p103
        $region22: #{tpu_custom_call.1} parent=11 // pred_check_branch
          %173 = sbr.rel (%p171) target = $region24
        $region23: #{tpu_custom_call.1} parent=11 // pred_region
          _
        $region24: #{tpu_custom_call.1} parent=11 // pred_fallthru
          _
        // Predicated region
        $region25: #{tpu_custom_call.1} parent=11 // pred_check
          %p174 = pneg %p124
        $region26: #{tpu_custom_call.1} parent=11 // pred_check_branch
          %176 = sbr.rel (%p174) target = $region28
        $region27: #{tpu_custom_call.1} parent=11 // pred_region
          _
        $region28: #{tpu_custom_call.1} parent=11 // pred_fallthru
          _
      $region12: #{tpu_custom_call.1} parent=5 // pred_fallthru
        _
      %p177 = scmp.lt.s32.totalorder %s14, 2
      // Predicated region
      $region29: #{tpu_custom_call.1} parent=5 // pred_check
        %p178 = pneg %p177
      $region30: #{tpu_custom_call.1} parent=5 // pred_check_branch
        %180 = sbr.rel (%p178) target = $region32
      $region31: #{tpu_custom_call.1} parent=5 // pred_region
        // Predicated region
        $region33: #{tpu_custom_call.1} parent=31 // pred_check
          %p181 = pneg %p34
        $region34: #{tpu_custom_call.1} parent=31 // pred_check_branch
          %183 = sbr.rel (%p181) target = $region36
        $region35: #{tpu_custom_call.1} parent=31 // pred_region
          %p184 = scmp.lt.s32.totalorder %s14, 1
          %s185 = scalar_select %p184, %s14, 1
          %s186 = smul.addr %s185, 32
          %s187 = smul.addr %s186, 8
          %s188 = scalar_lea.vmem %s0, %s187
        $region36: #{tpu_custom_call.1} parent=31 // pred_fallthru
          _
      $region32: #{tpu_custom_call.1} parent=5 // pred_fallthru
        _
      %p189 = scmp.le.s32.totalorder 1, %s14
      %p190 = scmp.lt.s32.totalorder %s14, 3
      %p191 = pnand %p189, %p190
      %p192 = pneg %p191
      // Predicated region
      $region37: #{tpu_custom_call.1} parent=5 // pred_check
        _
      $region38: #{tpu_custom_call.1} parent=5 // pred_check_branch
        %194 = sbr.rel (%p191) target = $region40
      $region39: #{tpu_custom_call.1} parent=5 // pred_region
        %s195 = ssub.s32 %s14, 1
        %p196 = scmp.lt.s32.totalorder %s19, 1
        %s197 = scalar_select %p196, %s19, 1
        %s198 = smul.addr %s197, 32
        %s199 = smul.addr %s198, 8
        %s200 = scalar_lea.vmem %s0, %s199
        %p201 = pneg %p40
        %p202 = pneg %p37
        %p203 = pneg %p61
        %p204 = pneg %p58
        %p205 = pneg %p82
        %p206 = pneg %p79
        %p207 = pneg %p103
        %p208 = pneg %p100
        %p209 = pneg %p124
        %p210 = pneg %p121
        %p211 = pneg %p150
        %p212 = pneg %p147
        %s213 = sand.u32 %s137, 1
        %s214 = scalar_lea.sflag [#allocation3], %s213
        %s215 = sand.u32 %s137, 1
        %s216 = scalar_lea.vmem [#allocation2], %s215
        %p217 = scmp.lt.s32.totalorder %s19, 1
        %s218 = scalar_select %p217, %s19, 1
        %s219 = smul.addr %s218, 32
        %s220 = smul.addr %s219, 8
        %s221 = scalar_lea.vmem %s0, %s220
        %v222 = vld [vmem:[%s221] sm:$0xff]
        %v223 = vld [vmem:[%s221 + $0x8] sm:$0xff]
        %v224 = vld [vmem:[%s221 + $0x10] sm:$0xff]
        %v225 = vld [vmem:[%s221 + $0x18] sm:$0xff]
        %v226 = vld [vmem:[%s221 + $0x20] sm:$0xff]
        %v227 = vld [vmem:[%s221 + $0x28] sm:$0xff]
        %v228 = vld [vmem:[%s221 + $0x30] sm:$0xff]
        %v229 = vld [vmem:[%s221 + $0x38] sm:$0xff]
        %v230 = vld [vmem:[%s221 + $0x40] sm:$0xff]
        %v231 = vld [vmem:[%s221 + $0x48] sm:$0xff]
        %v232 = vld [vmem:[%s221 + $0x50] sm:$0xff]
        %v233 = vld [vmem:[%s221 + $0x58] sm:$0xff]
        %v234 = vld [vmem:[%s221 + $0x60] sm:$0xff]
        %v235 = vld [vmem:[%s221 + $0x68] sm:$0xff]
        %v236 = vld [vmem:[%s221 + $0x70] sm:$0xff]
        %v237 = vld [vmem:[%s221 + $0x78] sm:$0xff]
        %v238 = vld [vmem:[%s221 + $0x80] sm:$0xff]
        %v239 = vld [vmem:[%s221 + $0x88] sm:$0xff]
        %v240 = vld [vmem:[%s221 + $0x90] sm:$0xff]
        %v241 = vld [vmem:[%s221 + $0x98] sm:$0xff]
        %v242 = vld [vmem:[%s221 + $0xa0] sm:$0xff]
        %v243 = vld [vmem:[%s221 + $0xa8] sm:$0xff]
        %v244 = vld [vmem:[%s221 + $0xb0] sm:$0xff]
        %v245 = vld [vmem:[%s221 + $0xb8] sm:$0xff]
        %v246 = vld [vmem:[%s221 + $0xc0] sm:$0xff]
        %v247 = vld [vmem:[%s221 + $0xc8] sm:$0xff]
        %v248 = vld [vmem:[%s221 + $0xd0] sm:$0xff]
        %v249 = vld [vmem:[%s221 + $0xd8] sm:$0xff]
        %v250 = vld [vmem:[%s221 + $0xe0] sm:$0xff]
        %v251 = vld [vmem:[%s221 + $0xe8] sm:$0xff]
        %v252 = vld [vmem:[%s221 + $0xf0] sm:$0xff]
        %v253 = vld [vmem:[%s221 + $0xf8] sm:$0xff]
        %254 = vxpose.xlu0.b32.start [1/16] %v222, 128
        %255 = vxpose.xlu0.b32.cont [2/16] %v223, 128
        %256 = vxpose.xlu0.b32.cont [3/16] %v224, 128
        %257 = vxpose.xlu0.b32.cont [4/16] %v225, 128
        %258 = vxpose.xlu0.b32.cont [5/16] %v226, 128
        %259 = vxpose.xlu0.b32.cont [6/16] %v227, 128
        %260 = vxpose.xlu0.b32.cont [7/16] %v228, 128
        %261 = vxpose.xlu0.b32.cont [8/16] %v229, 128
        %262 = vxpose.xlu0.b32.cont [9/16] %v230, 128
        %263 = vxpose.xlu0.b32.cont [10/16] %v231, 128
        %264 = vxpose.xlu0.b32.cont [11/16] %v232, 128
        %265 = vxpose.xlu0.b32.cont [12/16] %v233, 128
        %266 = vxpose.xlu0.b32.cont [13/16] %v234, 128
        %267 = vxpose.xlu0.b32.cont [14/16] %v235, 128
        %268 = vxpose.xlu0.b32.cont [15/16] %v236, 128
        %269 = vxpose.xlu0.b32.end [16/16] %v237, 128
        %v270 = vpop.trf.xlu0
        %v271 = vpop.trf.xlu0
        %v272 = vpop.trf.xlu0
        %v273 = vpop.trf.xlu0
        %v274 = vpop.trf.xlu0
        %v275 = vpop.trf.xlu0
        %v276 = vpop.trf.xlu0
        %v277 = vpop.trf.xlu0
        %v278 = vpop.trf.xlu0
        %v279 = vpop.trf.xlu0
        %v280 = vpop.trf.xlu0
        %v281 = vpop.trf.xlu0
        %v282 = vpop.trf.xlu0
        %v283 = vpop.trf.xlu0
        %v284 = vpop.trf.xlu0
        %v285 = vpop.trf.xlu0
        %286 = vxpose.xlu0.b32.start [1/16] %v238, 128
        %287 = vxpose.xlu0.b32.cont [2/16] %v239, 128
        %288 = vxpose.xlu0.b32.cont [3/16] %v240, 128
        %289 = vxpose.xlu0.b32.cont [4/16] %v241, 128
        %290 = vxpose.xlu0.b32.cont [5/16] %v242, 128
        %291 = vxpose.xlu0.b32.cont [6/16] %v243, 128
        %292 = vxpose.xlu0.b32.cont [7/16] %v244, 128
        %293 = vxpose.xlu0.b32.cont [8/16] %v245, 128
        %294 = vxpose.xlu0.b32.cont [9/16] %v246, 128
        %295 = vxpose.xlu0.b32.cont [10/16] %v247, 128
        %296 = vxpose.xlu0.b32.cont [11/16] %v248, 128
        %297 = vxpose.xlu0.b32.cont [12/16] %v249, 128
        %298 = vxpose.xlu0.b32.cont [13/16] %v250, 128
        %299 = vxpose.xlu0.b32.cont [14/16] %v251, 128
        %300 = vxpose.xlu0.b32.cont [15/16] %v252, 128
        %301 = vxpose.xlu0.b32.end [16/16] %v253, 128
        %v302 = vpop.trf.xlu0
        %v303 = vpop.trf.xlu0
        %v304 = vpop.trf.xlu0
        %v305 = vpop.trf.xlu0
        %v306 = vpop.trf.xlu0
        %v307 = vpop.trf.xlu0
        %v308 = vpop.trf.xlu0
        %v309 = vpop.trf.xlu0
        %v310 = vpop.trf.xlu0
        %v311 = vpop.trf.xlu0
        %v312 = vpop.trf.xlu0
        %v313 = vpop.trf.xlu0
        %v314 = vpop.trf.xlu0
        %v315 = vpop.trf.xlu0
        %v316 = vpop.trf.xlu0
        %v317 = vpop.trf.xlu0
        %v318 = vld [vmem:[%s1] sm:$0xff]
        %v319 = vld [vmem:[%s1 + $0x8] sm:$0xff]
        %v320 = vld [vmem:[%s1 + $0x10] sm:$0xff]
        %v321 = vld [vmem:[%s1 + $0x18] sm:$0xff]
        %v322 = vld [vmem:[%s1 + $0x20] sm:$0xff]
        %v323 = vld [vmem:[%s1 + $0x28] sm:$0xff]
        %v324 = vld [vmem:[%s1 + $0x30] sm:$0xff]
        %v325 = vld [vmem:[%s1 + $0x38] sm:$0xff]
        %v326 = vld [vmem:[%s1 + $0x40] sm:$0xff]
        %v327 = vld [vmem:[%s1 + $0x48] sm:$0xff]
        %v328 = vld [vmem:[%s1 + $0x50] sm:$0xff]
        %v329 = vld [vmem:[%s1 + $0x58] sm:$0xff]
        %v330 = vld [vmem:[%s1 + $0x60] sm:$0xff]
        %v331 = vld [vmem:[%s1 + $0x68] sm:$0xff]
        %v332 = vld [vmem:[%s1 + $0x70] sm:$0xff]
        %v333 = vld [vmem:[%s1 + $0x78] sm:$0xff]
        %v334 = vld [vmem:[%s1 + $0x80] sm:$0xff]
        %v335 = vld [vmem:[%s1 + $0x88] sm:$0xff]
        %v336 = vld [vmem:[%s1 + $0x90] sm:$0xff]
        %v337 = vld [vmem:[%s1 + $0x98] sm:$0xff]
        %v338 = vld [vmem:[%s1 + $0xa0] sm:$0xff]
        %v339 = vld [vmem:[%s1 + $0xa8] sm:$0xff]
        %v340 = vld [vmem:[%s1 + $0xb0] sm:$0xff]
        %v341 = vld [vmem:[%s1 + $0xb8] sm:$0xff]
        %v342 = vld [vmem:[%s1 + $0xc0] sm:$0xff]
        %v343 = vld [vmem:[%s1 + $0xc8] sm:$0xff]
        %v344 = vld [vmem:[%s1 + $0xd0] sm:$0xff]
        %v345 = vld [vmem:[%s1 + $0xd8] sm:$0xff]
        %v346 = vld [vmem:[%s1 + $0xe0] sm:$0xff]
        %v347 = vld [vmem:[%s1 + $0xe8] sm:$0xff]
        %v348 = vld [vmem:[%s1 + $0xf0] sm:$0xff]
        %v349 = vld [vmem:[%s1 + $0xf8] sm:$0xff]
        %v350 = vld [vmem:[%s1 + $0x100] sm:$0xff]
        %v351 = vld [vmem:[%s1 + $0x108] sm:$0xff]
        %v352 = vld [vmem:[%s1 + $0x110] sm:$0xff]
        %v353 = vld [vmem:[%s1 + $0x118] sm:$0xff]
        %v354 = vld [vmem:[%s1 + $0x120] sm:$0xff]
        %v355 = vld [vmem:[%s1 + $0x128] sm:$0xff]
        %v356 = vld [vmem:[%s1 + $0x130] sm:$0xff]
        %v357 = vld [vmem:[%s1 + $0x138] sm:$0xff]
        %v358 = vld [vmem:[%s1 + $0x140] sm:$0xff]
        %v359 = vld [vmem:[%s1 + $0x148] sm:$0xff]
        %v360 = vld [vmem:[%s1 + $0x150] sm:$0xff]
        %v361 = vld [vmem:[%s1 + $0x158] sm:$0xff]
        %v362 = vld [vmem:[%s1 + $0x160] sm:$0xff]
        %v363 = vld [vmem:[%s1 + $0x168] sm:$0xff]
        %v364 = vld [vmem:[%s1 + $0x170] sm:$0xff]
        %v365 = vld [vmem:[%s1 + $0x178] sm:$0xff]
        %v366 = vld [vmem:[%s1 + $0x180] sm:$0xff]
        %v367 = vld [vmem:[%s1 + $0x188] sm:$0xff]
        %v368 = vld [vmem:[%s1 + $0x190] sm:$0xff]
        %v369 = vld [vmem:[%s1 + $0x198] sm:$0xff]
        %v370 = vld [vmem:[%s1 + $0x1a0] sm:$0xff]
        %v371 = vld [vmem:[%s1 + $0x1a8] sm:$0xff]
        %v372 = vld [vmem:[%s1 + $0x1b0] sm:$0xff]
        %v373 = vld [vmem:[%s1 + $0x1b8] sm:$0xff]
        %v374 = vld [vmem:[%s1 + $0x1c0] sm:$0xff]
        %v375 = vld [vmem:[%s1 + $0x1c8] sm:$0xff]
        %v376 = vld [vmem:[%s1 + $0x1d0] sm:$0xff]
        %v377 = vld [vmem:[%s1 + $0x1d8] sm:$0xff]
        %v378 = vld [vmem:[%s1 + $0x1e0] sm:$0xff]
        %v379 = vld [vmem:[%s1 + $0x1e8] sm:$0xff]
        %v380 = vld [vmem:[%s1 + $0x1f0] sm:$0xff]
        %v381 = vld [vmem:[%s1 + $0x1f8] sm:$0xff]
        %382 = vmatpush.msra.mxu0 %v348
        %383 = vmatpush.msra.mxu0 %v346
        %384 = vmatpush.msra.mxu0 %v344
        %385 = vmatpush.msra.mxu0 %v342
        %386 = vmatpush.msra.mxu0 %v340
        %387 = vmatpush.msra.mxu0 %v338
        %388 = vmatpush.msra.mxu0 %v336
        %389 = vmatpush.msra.mxu0 %v334
        %390 = vmatpush.msra.mxu0 %v332
        %391 = vmatpush.msra.mxu0 %v330
        %392 = vmatpush.msra.mxu0 %v328
        %393 = vmatpush.msra.mxu0 %v326
        %394 = vmatpush.msra.mxu0 %v324
        %395 = vmatpush.msra.mxu0 %v322
        %396 = vmatpush.msra.mxu0 %v320
        %397 = vmatpush.msra.mxu0 %v318
        %398 = vmatmul.f32.gmra.mxu0 %v270
        %v399 = vpop.f32.mrf.mxu0
        %v400 = vadd.f32 0.0, %v399
        %401 = vdwg.mxu0
        %402 = vmatpush.msra.mxu0 %v380
        %403 = vmatpush.msra.mxu0 %v378
        %404 = vmatpush.msra.mxu0 %v376
        %405 = vmatpush.msra.mxu0 %v374
        %406 = vmatpush.msra.mxu0 %v372
        %407 = vmatpush.msra.mxu0 %v370
        %408 = vmatpush.msra.mxu0 %v368
        %409 = vmatpush.msra.mxu0 %v366
        %410 = vmatpush.msra.mxu0 %v364
        %411 = vmatpush.msra.mxu0 %v362
        %412 = vmatpush.msra.mxu0 %v360
        %413 = vmatpush.msra.mxu0 %v358
        %414 = vmatpush.msra.mxu0 %v356
        %415 = vmatpush.msra.mxu0 %v354
        %416 = vmatpush.msra.mxu0 %v352
        %417 = vmatpush.msra.mxu0 %v350
        %418 = vmatmul.f32.gmra.mxu0 %v302
        %v419 = vpop.f32.mrf.mxu0
        %v420 = vadd.f32 %v400, %v419
        %421 = vdwg.mxu0
        %422 = vmatpush.msra.mxu0 %v349
        %423 = vmatpush.msra.mxu0 %v347
        %424 = vmatpush.msra.mxu0 %v345
        %425 = vmatpush.msra.mxu0 %v343
        %426 = vmatpush.msra.mxu0 %v341
        %427 = vmatpush.msra.mxu0 %v339
        %428 = vmatpush.msra.mxu0 %v337
        %429 = vmatpush.msra.mxu0 %v335
        %430 = vmatpush.msra.mxu0 %v333
        %431 = vmatpush.msra.mxu0 %v331
        %432 = vmatpush.msra.mxu0 %v329
        %433 = vmatpush.msra.mxu0 %v327
        %434 = vmatpush.msra.mxu0 %v325
        %435 = vmatpush.msra.mxu0 %v323
        %436 = vmatpush.msra.mxu0 %v321
        %437 = vmatpush.msra.mxu0 %v319
        %438 = vmatmul.f32.gmra.mxu0 %v270
        %v439 = vpop.f32.mrf.mxu0
        %v440 = vadd.f32 0.0, %v439
        %441 = vdwg.mxu0
        %442 = vmatpush.msra.mxu0 %v381
        %443 = vmatpush.msra.mxu0 %v379
        %444 = vmatpush.msra.mxu0 %v377
        %445 = vmatpush.msra.mxu0 %v375
        %446 = vmatpush.msra.mxu0 %v373
        %447 = vmatpush.msra.mxu0 %v371
        %448 = vmatpush.msra.mxu0 %v369
        %449 = vmatpush.msra.mxu0 %v367
        %450 = vmatpush.msra.mxu0 %v365
        %451 = vmatpush.msra.mxu0 %v363
        %452 = vmatpush.msra.mxu0 %v361
        %453 = vmatpush.msra.mxu0 %v359
        %454 = vmatpush.msra.mxu0 %v357
        %455 = vmatpush.msra.mxu0 %v355
        %456 = vmatpush.msra.mxu0 %v353
        %457 = vmatpush.msra.mxu0 %v351
        %458 = vmatmul.f32.gmra.mxu0 %v302
        %v459 = vpop.f32.mrf.mxu0
        %v460 = vadd.f32 %v440, %v459
        %461 = vdwg.mxu0
        %v462 = vtanh.pop %v420
        %v463 = vtanh.pop %v460
        %v464 = vld [vmem:[%s2] sm:$0x3]
        %v466 = vperm.slane %v464, 0
        %v467 = vperm.slane %v464, 1
        %v470 = vmul.f32 %v462, %v466
        %v471 = vmul.f32 %v463, %v467
        %v472 = vadd.f32 %v470, %v471
        %473 = vadd.xlane.f32.xlu0 %v472
        %v474 = vpop.xlane.xlu0 %473
        %v475 = vmul.f32 %v474, 0.0625
        %v476 = vmul.f32 %v475, 1.442695
        %v477 = vpow.pop %v476
        %v478 = vrot.slane %v477, 4
        %v479 = vadd.f32 %v477, %v478
        %v480 = vrot.slane %v479, 2
        %v481 = vadd.f32 %v479, %v480
        %v482 = vrot.slane %v481, 1
        %v483 = vadd.f32 %v481, %v482
        %v484 = vmul.f32 %v477, %v270
        %v485 = vmul.f32 %v477, %v302
        %v486 = vrot.slane %v484, 4
        %v487 = vadd.f32 %v484, %v486
        %v488 = vrot.slane %v487, 2
        %v489 = vadd.f32 %v487, %v488
        %v490 = vrot.slane %v489, 1
        %v491 = vadd.f32 %v489, %v490
        %v492 = vrot.slane %v485, 4
        %v493 = vadd.f32 %v485, %v492
        %v494 = vrot.slane %v493, 2
        %v495 = vadd.f32 %v493, %v494
        %v496 = vrot.slane %v495, 1
        %v497 = vadd.f32 %v495, %v496
        %v498 = vrcp.pop %v483
        %v499 = vmul.f32 %v483, %v498
        %v500 = vsub.f32 1.0, %v499
        %v501 = vmul.f32 %v498, %v500
        %v502 = vadd.f32 %v498, %v501
        %vm503 = vweird.f32 %v483
        %vm504 = vweird.f32 %v498
        %vm505 = vmor %vm503, %vm504
        %v506 = vsel %vm505, %v498, %v502
        %v507 = vand.u32 2147483647, %v483
        %vm508 = vcmp.eq.f32.partialorder %v507, 8.507059e+37
        %v509 = vand.u32 %v483, 2147483648
        %v510 = vor.u32 1.1754944e-38, %v509
        %v511 = vsel %vm508, %v510, %v506
        %v512 = vmul.f32 1.0, %v511
        %v513 = vmul.f32 %v491, %v512
        %v514 = vmul.f32 %v497, %v512
        %v515 = vld [vmem:[%s3] sm:$0xff]
        %v516 = vld [vmem:[%s3 + $0x8] sm:$0xff]
        %v517 = vld [vmem:[%s3 + $0x10] sm:$0xff]
        %v518 = vld [vmem:[%s3 + $0x18] sm:$0xff]
        %v519 = vld [vmem:[%s3 + $0x20] sm:$0xff]
        %v520 = vld [vmem:[%s3 + $0x28] sm:$0xff]
        %v521 = vld [vmem:[%s3 + $0x30] sm:$0xff]
        %v522 = vld [vmem:[%s3 + $0x38] sm:$0xff]
        %v523 = vld [vmem:[%s3 + $0x40] sm:$0xff]
        %v524 = vld [vmem:[%s3 + $0x48] sm:$0xff]
        %v525 = vld [vmem:[%s3 + $0x50] sm:$0xff]
        %v526 = vld [vmem:[%s3 + $0x58] sm:$0xff]
        %v527 = vld [vmem:[%s3 + $0x60] sm:$0xff]
        %v528 = vld [vmem:[%s3 + $0x68] sm:$0xff]
        %v529 = vld [vmem:[%s3 + $0x70] sm:$0xff]
        %v530 = vld [vmem:[%s3 + $0x78] sm:$0xff]
        %v531 = vld [vmem:[%s3 + $0x80] sm:$0xff]
        %v532 = vld [vmem:[%s3 + $0x88] sm:$0xff]
        %v533 = vld [vmem:[%s3 + $0x90] sm:$0xff]
        %v534 = vld [vmem:[%s3 + $0x98] sm:$0xff]
        %v535 = vld [vmem:[%s3 + $0xa0] sm:$0xff]
        %v536 = vld [vmem:[%s3 + $0xa8] sm:$0xff]
        %v537 = vld [vmem:[%s3 + $0xb0] sm:$0xff]
        %v538 = vld [vmem:[%s3 + $0xb8] sm:$0xff]
        %v539 = vld [vmem:[%s3 + $0xc0] sm:$0xff]
        %v540 = vld [vmem:[%s3 + $0xc8] sm:$0xff]
        %v541 = vld [vmem:[%s3 + $0xd0] sm:$0xff]
        %v542 = vld [vmem:[%s3 + $0xd8] sm:$0xff]
        %v543 = vld [vmem:[%s3 + $0xe0] sm:$0xff]
        %v544 = vld [vmem:[%s3 + $0xe8] sm:$0xff]
        %v545 = vld [vmem:[%s3 + $0xf0] sm:$0xff]
        %v546 = vld [vmem:[%s3 + $0xf8] sm:$0xff]
        %v547 = vld [vmem:[%s4] sm:$0x1]
        %548 = vmatpush.msra.mxu0 %v530
        %549 = vmatpush.msra.mxu0 %v529
        %550 = vmatpush.msra.mxu0 %v528
        %551 = vmatpush.msra.mxu0 %v527
        %552 = vmatpush.msra.mxu0 %v526
        %553 = vmatpush.msra.mxu0 %v525
        %554 = vmatpush.msra.mxu0 %v524
        %555 = vmatpush.msra.mxu0 %v523
        %556 = vmatpush.msra.mxu0 %v522
        %557 = vmatpush.msra.mxu0 %v521
        %558 = vmatpush.msra.mxu0 %v520
        %559 = vmatpush.msra.mxu0 %v519
        %560 = vmatpush.msra.mxu0 %v518
        %561 = vmatpush.msra.mxu0 %v517
        %562 = vmatpush.msra.mxu0 %v516
        %563 = vmatpush.msra.mxu0 %v515
        %564 = vmatmul.f32.gmra.mxu0 %v513
        %v565 = vpop.f32.mrf.mxu0
        %v566 = vadd.f32 %v547, %v565
        %567 = vdwg.mxu0
        %568 = vmatpush.msra.mxu0 %v546
        %569 = vmatpush.msra.mxu0 %v545
        %570 = vmatpush.msra.mxu0 %v544
        %571 = vmatpush.msra.mxu0 %v543
        %572 = vmatpush.msra.mxu0 %v542
        %573 = vmatpush.msra.mxu0 %v541
        %574 = vmatpush.msra.mxu0 %v540
        %575 = vmatpush.msra.mxu0 %v539
        %576 = vmatpush.msra.mxu0 %v538
        %577 = vmatpush.msra.mxu0 %v537
        %578 = vmatpush.msra.mxu0 %v536
        %579 = vmatpush.msra.mxu0 %v535
        %580 = vmatpush.msra.mxu0 %v534
        %581 = vmatpush.msra.mxu0 %v533
        %582 = vmatpush.msra.mxu0 %v532
        %583 = vmatpush.msra.mxu0 %v531
        %584 = vmatmul.f32.gmra.mxu0 %v514
        %v585 = vpop.f32.mrf.mxu0
        %v586 = vadd.f32 %v566, %v585
        %587 = vdwg.mxu0
        %vm588 = vcmask 32768
        %589 = vst.msk [vmem:[%s216] sm:$0x1] %vm588, %v586
        %s590 = sand.u32 %s137, 1
        %s591 = scalar_lea.sflag [#allocation3], %s590
        %s592 = sand.u32 %s137, 1
        %s593 = scalar_lea.vmem [#allocation2], %s592
        // Predicated region
        $region41: #{tpu_custom_call.1} parent=39 // pred_check
          %p594 = pneg %p147
        $region42: #{tpu_custom_call.1} parent=39 // pred_check_branch
          %596 = sbr.rel (%p594) target = $region44
        $region43: #{tpu_custom_call.1} parent=39 // pred_region
          %598 = vsyncadd %s591, 0
          %s599 = scalar_lea.hbm %s5, %s19
          %s601 = sshll.u32 %s593, 4
          %s602 = int_to_ptr.vmem [resolvable:$true] %s601
          %s603 = sshll.u32 %s599, 4
          %s604 = int_to_ptr.hbm [resolvable:$true] %s603
          %606 = dma.vmem_to_hbm [thread:$0]  %s602, 16, %s604, %s591
        $region44: #{tpu_custom_call.1} parent=39 // pred_fallthru
          _
      $region40: #{tpu_custom_call.1} parent=5 // pred_fallthru
        _
      %p607 = scmp.le.s32.totalorder 2, %s14
      // Predicated region
      $region45: #{tpu_custom_call.1} parent=5 // pred_check
        %p608 = pneg %p607
      $region46: #{tpu_custom_call.1} parent=5 // pred_check_branch
        %610 = sbr.rel (%p608) target = $region48
      $region47: #{tpu_custom_call.1} parent=5 // pred_region
        %s611 = ssub.s32 %s14, 2
        // Predicated region
        $region49: #{tpu_custom_call.1} parent=47 // pred_check
          %p612 = pneg %p153
        $region50: #{tpu_custom_call.1} parent=47 // pred_check_branch
          %614 = sbr.rel (%p612) target = $region52
        $region51: #{tpu_custom_call.1} parent=47 // pred_region
          %s615 = sand.u32 %s138, 1
          %s616 = scalar_lea.sflag [#allocation3], %s615
          %s617 = sand.u32 %s138, 1
          %s618 = scalar_lea.vmem [#allocation2], %s617
          %620 = dma.done %s616, 16
        $region52: #{tpu_custom_call.1} parent=47 // pred_fallthru
          _
      $region48: #{tpu_custom_call.1} parent=5 // pred_fallthru
        _
    $region6: #{tpu_custom_call.1} parent=1 // loop_footer
      %s18 = sadd.s32 1, %s14
    $region7: #{tpu_custom_call.1} parent=1 // loop_footer_branch
      %13 = sbr.rel target = $region3
    $region8: #{tpu_custom_call.1} parent=1 // loop_exit
      _
    %621 = vsyncpa [#allocation3], 1
    %s622 = scalar_lea.sflag [#allocation3], 1
    %623 = vsyncpa %s622, 1

</llo_original>
